<compile_context>
chip_gen: v7x
topology: tpu7x:2x2x1
jax: 0.10.0
libtpu: 0.0.40
codegen_flags: <defaults>
</compile_context>

<pallas_src>
import jax
import jax.numpy as jnp
import numpy as np
from jax.experimental import pallas as pl
from jax.experimental.pallas import tpu as pltpu

_LANE = 128            # joints per row (lane axis of the validity view)
_ROWW = 3 * _LANE      # 384 interleaved xyz lanes per row
_SUB = 8               # f32 sublane tile

# 0/1 selection matrix: validity of joint u -> interleaved lane 3u + 1.
# Exactly one nonzero per output lane, so the MXU expansion in the kernel is
# exact for binary validity regardless of matmul precision.
_EXPAND = np.zeros((_LANE, _ROWW), np.float32)
_EXPAND[np.arange(_LANE), 3 * np.arange(_LANE) + 1] = 1.0


def _cdiv(a, b):
    return -(-a // b)


def _round_up(x, m):
    return _cdiv(x, m) * m


def _mpjpe_kernel(expand_ref, pred_ref, gt_ref, valid_ref, loss_ref, vsum_ref):
    # expand_ref: (128, 384) constant selection matrix (block index constant,
    #   so it is fetched once).
    # pred_ref / gt_ref: (tr, 384) interleaved xyz coordinates, lane-dense.
    # valid_ref: (tr, 128) per-joint validity.
    # loss_ref: (8, 384) / vsum_ref: (8, 128): per-chunk accumulators, resident
    #   in VMEM across the step axis (output block index constant along it).
    k = pl.program_id(1)

    @pl.when(k == 0)
    def _():
        loss_ref[...] = jnp.zeros_like(loss_ref)
        vsum_ref[...] = jnp.zeros_like(vsum_ref)

    # f32 compute regardless of input dtype (v5e has no bf16 VPU/EUP path);
    # bf16 pred/gt or int8/bool validity stream at half/quarter the HBM bytes.
    pred = pred_ref[...].astype(jnp.float32)
    gt = gt_ref[...].astype(jnp.float32)
    v = valid_ref[...].astype(jnp.float32)

    d = gt - pred
    sq = d * d
    # Lanes {3u, 3u+1, 3u+2} of a row hold joint u's squared x/y/z deltas.
    # s[l] = sq[l-1] + sq[l] + sq[l+1]: the complete per-joint sum lands on the
    # middle lane 3u+1 (shifts of 1 and _ROWW-1 keep this true under either
    # roll sign convention; the wrapped lanes 0/383 are never selected below).
    s = sq + pltpu.roll(sq, 1, axis=1) + pltpu.roll(sq, _ROWW - 1, axis=1)
    dist = jnp.sqrt(s)                          # EUP; only lanes 3u+1 are used

    # Expand validity onto the interleaved lanes: vexp[m, 3u+1] = v[m, u],
    # 0 elsewhere (MXU, otherwise idle; exact for 0/1 validity).
    vexp = jnp.dot(v, expand_ref[...], preferred_element_type=jnp.float32)

    contrib = dist * vexp                       # masked per-joint error

    # Row-0-only accumulation into the tiny resident output blocks.
    loss_ref[0:1, :] += jnp.sum(contrib, axis=0, keepdims=True)
    vsum_ref[0:1, :] += jnp.sum(v, axis=0, keepdims=True)


def _mpjpe_pallas(keypoints_pred, keypoints_gt, keypoints_binary_validity, *,
                  row_tile=1024, num_chunks=1):
    B, J, D = keypoints_pred.shape
    assert D == 3
    N = B * J

    num_chunks = max(1, int(num_chunks))
    row_tile = _round_up(max(int(row_tile), _SUB), _SUB)

    rows = _cdiv(N, _LANE)                              # rows of 128 joints
    steps = max(1, _cdiv(rows, num_chunks * row_tile))  # steps per chunk
    blocks = num_chunks * steps
    tr = _round_up(_cdiv(rows, blocks), _SUB)           # rows per block (mult. of 8)
    rows_p = blocks * tr
    n_pad = rows_p * _LANE - N                          # zero-padded joints

    # Native memory order (no transpose): pure reshapes of the flat coordinate
    # stream; padded joints have pred = gt = validity = 0 so they contribute
    # nothing to either sum. The pad is a no-op when N is already aligned.
    pred_flat = keypoints_pred.reshape(-1)
    gt_flat = keypoints_gt.reshape(-1)
    val_flat = keypoints_binary_validity.reshape(-1)
    if n_pad:
        pred_flat = jnp.pad(pred_flat, (0, 3 * n_pad))
        gt_flat = jnp.pad(gt_flat, (0, 3 * n_pad))
        val_flat = jnp.pad(val_flat, (0, n_pad))
    pred2 = pred_flat.reshape(rows_p, _ROWW)
    gt2 = gt_flat.reshape(rows_p, _ROWW)
    val2 = val_flat.reshape(rows_p, _LANE)

    data_map = lambda c, k: (c * steps + k, 0)
    loss_part, valid_part = pl.pallas_call(
        _mpjpe_kernel,
        out_shape=(
            jax.ShapeDtypeStruct((num_chunks * _SUB, _ROWW), jnp.float32),
            jax.ShapeDtypeStruct((num_chunks * _SUB, _LANE), jnp.float32),
        ),
        grid_spec=pltpu.PrefetchScalarGridSpec(
            num_scalar_prefetch=0,
            grid=(num_chunks, steps),
            in_specs=[
                pl.BlockSpec((_LANE, _ROWW), lambda c, k: (0, 0)),
                pl.BlockSpec((tr, _ROWW), data_map),
                pl.BlockSpec((tr, _ROWW), data_map),
                pl.BlockSpec((tr, _LANE), data_map),
            ],
            out_specs=[
                pl.BlockSpec((_SUB, _ROWW), lambda c, k: (c, 0)),
                pl.BlockSpec((_SUB, _LANE), lambda c, k: (c, 0)),
            ],
        ),
        compiler_params=pltpu.CompilerParams(
            # v5e/v6e are single-TC: num_chunks=1 keeps axis 0 trivial. On v7x
            # pass num_chunks=2 so this "parallel" axis can shard across both
            # TensorCores (their DMA engines are needed to reach HBM roofline).
            dimension_semantics=("parallel", "arbitrary")),
    )(jnp.asarray(_EXPAND), pred2, gt2, val2)

    loss_sum = jnp.sum(loss_part)            # few-KiB read-back of the partials
    valid_sum = jnp.sum(valid_part)
    return loss_sum / jnp.maximum(jnp.float32(1.0), valid_sum)


def mpjpe_ref(keypoints_pred, keypoints_gt, keypoints_binary_validity):
    pred = keypoints_pred.astype(jnp.float32)
    gt = keypoints_gt.astype(jnp.float32)
    val = keypoints_binary_validity.astype(jnp.float32)
    pjpe = jnp.sqrt(jnp.sum((gt - pred) ** 2, axis=-1))
    loss = jnp.sum(pjpe * jnp.squeeze(val, -1))
    return loss / jnp.maximum(jnp.float32(1.0), jnp.sum(val))


def mpjpe(keypoints_pred, keypoints_gt, keypoints_binary_validity, *,
          row_tile=1024, num_chunks=1, min_pallas_joints=2048):
    """Mean per-joint position error; matches the PyTorch Mpjpe.forward."""
    B, J, _ = keypoints_pred.shape
    if B * J < min_pallas_joints:
        # Below a few thousand joints launch + pad overhead dominates; the
        # fused XLA elementwise+reduce is faster than any kernel.
        return mpjpe_ref(keypoints_pred, keypoints_gt, keypoints_binary_validity)
    return _mpjpe_pallas(keypoints_pred, keypoints_gt, keypoints_binary_validity,
                         row_tile=row_tile, num_chunks=num_chunks)


if __name__ == "__main__":
    key = jax.random.PRNGKey(0)
    k1, k2, k3 = jax.random.split(key, 3)

    B, J, D = 2, 17, 3  # batch, joints, xyz
    keypoints_pred = jax.random.normal(k1, (B, J, D), dtype=jnp.float32)
    keypoints_gt = jax.random.normal(k2, (B, J, D), dtype=jnp.float32)
    keypoints_binary_validity = (
        jax.random.uniform(k3, (B, J, 1)) > 0.3).astype(jnp.float32)

    ref = mpjpe_ref(keypoints_pred, keypoints_gt, keypoints_binary_validity)

    # Force the Pallas path at the demo size (the default would take the
    # small-N jnp fallback).
    loss = mpjpe(keypoints_pred, keypoints_gt, keypoints_binary_validity,
                 min_pallas_joints=0)
    loss = jax.block_until_ready(loss)
    assert jnp.allclose(loss, ref, rtol=1e-5, atol=1e-5), (loss, ref)

    # Exercise multi-step accumulation and the 2-chunk (v7x-style) path at a
    # modest size with non-trivial padding.
    B2, J2 = 64, 17
    kk1, kk2, kk3 = jax.random.split(jax.random.PRNGKey(1), 3)
    p2 = jax.random.normal(kk1, (B2, J2, 3), dtype=jnp.float32)
    g2 = jax.random.normal(kk2, (B2, J2, 3), dtype=jnp.float32)
    v2 = (jax.random.uniform(kk3, (B2, J2, 1)) > 0.5).astype(jnp.float32)
    ref2 = mpjpe_ref(p2, g2, v2)
    for kwargs in ({"row_tile": 8, "num_chunks": 1},
                   {"row_tile": 8, "num_chunks": 2}):
        out = jax.block_until_ready(_mpjpe_pallas(p2, g2, v2, **kwargs))
        assert jnp.allclose(out, ref2, rtol=1e-5, atol=1e-5), (kwargs, out, ref2)

    print("KERNEL_OK")
</pallas_src>

<mosaic_0001>
module attributes {stable_mosaic.version = 11 : i64} {
  func.func @_mpjpe_kernel(%arg0: i32, %arg1: i32, %arg2: memref<128x384xf32, #tpu.memory_space<vmem>>, %arg3: memref<8x384xf32, #tpu.memory_space<vmem>>, %arg4: memref<8x384xf32, #tpu.memory_space<vmem>>, %arg5: memref<8x128xf32, #tpu.memory_space<vmem>>, %arg6: memref<8x384xf32, #tpu.memory_space<vmem>>, %arg7: memref<8x128xf32, #tpu.memory_space<vmem>>) attributes {dimension_semantics = [#tpu.dimension_semantics<parallel>, #tpu.dimension_semantics<arbitrary>], iteration_bounds = array<i64: 1, 1>, scalar_prefetch = 0 : i64, scratch_operands = 0 : i64, tpu.core_type = #tpu.core_type<tc>, window_params = [{pipeline_mode = #tpu.pipeline_mode<synchronous>, transform_indices = @transform_0, window_bounds = array<i64: 128, 384>}, {transform_indices = @transform_1, window_bounds = array<i64: 8, 384>}, {transform_indices = @transform_2, window_bounds = array<i64: 8, 384>}, {transform_indices = @transform_3, window_bounds = array<i64: 8, 128>}, {transform_indices = @transform_4, window_bounds = array<i64: 8, 384>}, {transform_indices = @transform_5, window_bounds = array<i64: 8, 128>}]} {
    %c0_i32 = arith.constant 0 : i32
    %0 = arith.cmpi eq, %arg1, %c0_i32 : i32
    %1 = arith.extui %0 : i1 to i32
    %c0_i32_0 = arith.constant 0 : i32
    %2 = arith.cmpi ne, %1, %c0_i32_0 : i32
    scf.if %2 {
      %cst_18 = arith.constant 0.000000e+00 : f32
      %26 = vector.broadcast %cst_18 : f32 to vector<8x384xf32>
      %c0_19 = arith.constant 0 : index
      %c0_20 = arith.constant 0 : index
      %27 = vector.load %arg6[%c0_19, %c0_20] : memref<8x384xf32, #tpu.memory_space<vmem>>, vector<8x384xf32>
      tpu.vector_store %arg6[%c0_19, %c0_20], %26 {strides = array<i32>} : memref<8x384xf32, #tpu.memory_space<vmem>>, vector<8x384xf32>,
      %cst_21 = arith.constant 0.000000e+00 : f32
      %28 = vector.broadcast %cst_21 : f32 to vector<8x128xf32>
      %c0_22 = arith.constant 0 : index
      %c0_23 = arith.constant 0 : index
      %29 = vector.load %arg7[%c0_22, %c0_23] : memref<8x128xf32, #tpu.memory_space<vmem>>, vector<8x128xf32>
      tpu.vector_store %arg7[%c0_22, %c0_23], %28 {strides = array<i32>} : memref<8x128xf32, #tpu.memory_space<vmem>>, vector<8x128xf32>,
    } else {
    }
    %c0 = arith.constant 0 : index
    %c0_1 = arith.constant 0 : index
    %3 = vector.load %arg3[%c0, %c0_1] : memref<8x384xf32, #tpu.memory_space<vmem>>, vector<8x384xf32>
    %c0_2 = arith.constant 0 : index
    %c0_3 = arith.constant 0 : index
    %4 = vector.load %arg4[%c0_2, %c0_3] : memref<8x384xf32, #tpu.memory_space<vmem>>, vector<8x384xf32>
    %c0_4 = arith.constant 0 : index
    %c0_5 = arith.constant 0 : index
    %5 = vector.load %arg5[%c0_4, %c0_5] : memref<8x128xf32, #tpu.memory_space<vmem>>, vector<8x128xf32>
    %6 = arith.subf %4, %3 : vector<8x384xf32>
    %7 = arith.mulf %6, %6 : vector<8x384xf32>
    %c1_i32 = arith.constant 1 : i32
    %8 = tpu.dynamic_rotate %7 by %c1_i32 dim 1 : vector<8x384xf32>, i32 -> vector<8x384xf32>
    %9 = arith.addf %7, %8 : vector<8x384xf32>
    %c383_i32 = arith.constant 383 : i32
    %10 = tpu.dynamic_rotate %7 by %c383_i32 dim 1 : vector<8x384xf32>, i32 -> vector<8x384xf32>
    %11 = arith.addf %9, %10 : vector<8x384xf32>
    %12 = math.sqrt %11 : vector<8x384xf32>
    %c0_6 = arith.constant 0 : index
    %c0_7 = arith.constant 0 : index
    %13 = vector.load %arg2[%c0_6, %c0_7] : memref<128x384xf32, #tpu.memory_space<vmem>>, vector<128x384xf32>
    %cst = arith.constant dense<0.000000e+00> : vector<8x384xf32>
    %14 = tpu.matmul %5, %13, %cst {dimension_numbers = #tpu.dot_dimension_numbers<[1], [0], [0], [1], [0, 0, 1, 1], [], []>} : vector<8x128xf32>, vector<128x384xf32>, vector<8x384xf32> -> vector<8x384xf32>
    %15 = arith.mulf %12, %14 : vector<8x384xf32>
    %c0_8 = arith.constant 0 : index
    %c0_9 = arith.constant 0 : index
    %16 = vector.load %arg6[%c0_8, %c0_9] : memref<8x384xf32, #tpu.memory_space<vmem>>, vector<1x384xf32>
    %cst_10 = arith.constant dense<0.000000e+00> : vector<384xf32>
    %17 = vector.multi_reduction <add>, %15, %cst_10 [0] : vector<8x384xf32> to vector<384xf32>
    %18 = vector.shape_cast %17 : vector<384xf32> to vector<1x384xf32>
    %19 = arith.addf %16, %18 : vector<1x384xf32>
    %c0_11 = arith.constant 0 : index
    %c0_12 = arith.constant 0 : index
    %20 = vector.load %arg6[%c0_11, %c0_12] : memref<8x384xf32, #tpu.memory_space<vmem>>, vector<1x384xf32>
    tpu.vector_store %arg6[%c0_11, %c0_12], %19 {strides = array<i32>} : memref<8x384xf32, #tpu.memory_space<vmem>>, vector<1x384xf32>,
    %c0_13 = arith.constant 0 : index
    %c0_14 = arith.constant 0 : index
    %21 = vector.load %arg7[%c0_13, %c0_14] : memref<8x128xf32, #tpu.memory_space<vmem>>, vector<1x128xf32>
    %cst_15 = arith.constant dense<0.000000e+00> : vector<128xf32>
    %22 = vector.multi_reduction <add>, %5, %cst_15 [0] : vector<8x128xf32> to vector<128xf32>
    %23 = vector.shape_cast %22 : vector<128xf32> to vector<1x128xf32>
    %24 = arith.addf %21, %23 : vector<1x128xf32>
    %c0_16 = arith.constant 0 : index
    %c0_17 = arith.constant 0 : index
    %25 = vector.load %arg7[%c0_16, %c0_17] : memref<8x128xf32, #tpu.memory_space<vmem>>, vector<1x128xf32>
    tpu.vector_store %arg7[%c0_16, %c0_17], %24 {strides = array<i32>} : memref<8x128xf32, #tpu.memory_space<vmem>>, vector<1x128xf32>,
    return
  }
  func.func @transform_0(%arg0: i32, %arg1: i32) -> (i32, i32) {
    %c0_i32 = arith.constant 0 : i32
    %c0_i32_0 = arith.constant 0 : i32
    %c0_i32_1 = arith.constant 0 : i32
    return %c0_i32, %c0_i32_0 : i32, i32
  }
  func.func @transform_1(%arg0: i32, %arg1: i32) -> (i32, i32) {
    %c1_i32 = arith.constant 1 : i32
    %0 = arith.muli %arg0, %c1_i32 : i32
    %1 = arith.addi %0, %arg1 : i32
    %c0_i32 = arith.constant 0 : i32
    %c0_i32_0 = arith.constant 0 : i32
    return %1, %c0_i32 : i32, i32
  }
  func.func @transform_2(%arg0: i32, %arg1: i32) -> (i32, i32) {
    %c1_i32 = arith.constant 1 : i32
    %0 = arith.muli %arg0, %c1_i32 : i32
    %1 = arith.addi %0, %arg1 : i32
    %c0_i32 = arith.constant 0 : i32
    %c0_i32_0 = arith.constant 0 : i32
    return %1, %c0_i32 : i32, i32
  }
  func.func @transform_3(%arg0: i32, %arg1: i32) -> (i32, i32) {
    %c1_i32 = arith.constant 1 : i32
    %0 = arith.muli %arg0, %c1_i32 : i32
    %1 = arith.addi %0, %arg1 : i32
    %c0_i32 = arith.constant 0 : i32
    %c0_i32_0 = arith.constant 0 : i32
    return %1, %c0_i32 : i32, i32
  }
  func.func @transform_4(%arg0: i32, %arg1: i32) -> (i32, i32) {
    %c0_i32 = arith.constant 0 : i32
    %c0_i32_0 = arith.constant 0 : i32
    return %arg0, %c0_i32 : i32, i32
  }
  func.func @transform_5(%arg0: i32, %arg1: i32) -> (i32, i32) {
    %c0_i32 = arith.constant 0 : i32
    %c0_i32_0 = arith.constant 0 : i32
    return %arg0, %c0_i32 : i32, i32
  }
}

</mosaic_0001>

<llo_original>
// kernel: tpu_custom_call.1
$region0: #{tpu_custom_call.1}
  #allocation0 [shape = 'u32[]', space=smem, size = 0x4, offset = 0x4, fixed_abs, tag = 'smem constant byte address 0x4 - core index']
  #allocation1 [shape = 'u32[144,128]{1,0:T(1,128)}', space=vmem, size = 0x12000, scoped, tag = 'internal scratch']
  %s0 = inlined_call_operand.hbm [shape: f32[128,384], index: 0, kind: input, shape index: {}]
  %s1 = inlined_call_operand.hbm [shape: f32[8,384], index: 1, kind: input, shape index: {}]
  %s2 = inlined_call_operand.hbm [shape: f32[8,384], index: 2, kind: input, shape index: {}]
  %s3 = inlined_call_operand.vmem [shape: f32[8,128], index: 3, kind: input, shape index: {}]
  %s4 = inlined_call_operand.hbm [shape: f32[8,384], index: 4, kind: output, shape index: {0}]
  %s5 = inlined_call_operand.hbm [shape: f32[8,128], index: 5, kind: output, shape index: {1}]
  %6 = xla_tuple %s4, %s5
  %s7 = sld [smem:[#allocation0]]
  $region50: #{tpu_custom_call.1} parent=0
    _
  %s9 = ssub.s32 1, %s7
  %s10 = scalar_select 0, %s9, %s7
  $region1: #{tpu_custom_call.1} parent=0
    #allocation2 [shape = 'u8[196608]{0}', space=vmem, size = 0x30000, scoped, tag = 'input window, operand 0, single buffered']
    #allocation3 [shape = 's32[1]{0}', space=sflag, size = 0x4, scoped, tag = 'scoped memory for tpu_custom_call.1']
    #allocation4 [shape = 's32[1]{0}', space=sflag, size = 0x4, scoped, tag = 'scoped memory for tpu_custom_call.1']
    #allocation5 [shape = 'u8[12288]{0}', space=vmem, size = 0x3000, scoped, tag = 'input window, operand 1, single buffered']
    #allocation6 [shape = 's32[1]{0}', space=sflag, size = 0x4, scoped, tag = 'scoped memory for tpu_custom_call.1']
    #allocation7 [shape = 'u8[12288]{0}', space=vmem, size = 0x3000, scoped, tag = 'input window, operand 2, single buffered']
    #allocation8 [shape = 'u8[12288]{0}', space=vmem, size = 0x3000, scoped, tag = 'output window, operand 0, single buffered']
    #allocation9 [shape = 'u8[4096]{0}', space=vmem, size = 0x1000, scoped, tag = 'output window, operand 1, single buffered']
    #allocation10 [shape = 's32[1]{0}', space=sflag, size = 0x4, scoped, tag = 'scoped memory for tpu_custom_call.1']
    %11 = vsyncpa [#allocation3], 0
    %12 = vsyncpa [#allocation6], 0
    %13 = vsyncpa [#allocation4], 0
    %14 = vsyncpa [#allocation10], 0
    // Predicated region
    $region2: #{tpu_custom_call.1} parent=1 // pred_check
      _
    $region3: #{tpu_custom_call.1} parent=1 // pred_check_branch
      %16 = sbr.rel (0) target = $region5
    $region4: #{tpu_custom_call.1} parent=1 // pred_region
      %s18 = ssub.s32 6144, 6144
      %19 = vsyncadd [#allocation3], %s18
      %s20 = sshll.u32 [#allocation2], 4
      %s21 = int_to_ptr.vmem [resolvable:$true] %s20
      %26 = dma.hbm_to_vmem [thread:$0]  %s0, 6144, %s21, [#allocation3], 384, 384, 24
    $region5: #{tpu_custom_call.1} parent=1 // pred_fallthru
      _
    // Predicated region
    $region6: #{tpu_custom_call.1} parent=1 // pred_check
      _
    $region7: #{tpu_custom_call.1} parent=1 // pred_check_branch
      %28 = sbr.rel (0) target = $region9
    $region8: #{tpu_custom_call.1} parent=1 // pred_region
      %s29 = sadd.s32 0, 0
      %s31 = ssub.s32 384, 384
      %32 = vsyncadd [#allocation6], %s31
      %s33 = smul.addr %s29, 3
      %s34 = smul.addr %s33, 128
      %s35 = scalar_lea.hbm %s1, %s34
      %s37 = sshll.u32 [#allocation5], 4
      %s38 = int_to_ptr.vmem [resolvable:$true] %s37
      %40 = dma.hbm_to_vmem [thread:$0]  %s35, 384, %s38, [#allocation6]
    $region9: #{tpu_custom_call.1} parent=1 // pred_fallthru
      _
    // Predicated region
    $region10: #{tpu_custom_call.1} parent=1 // pred_check
      _
    $region11: #{tpu_custom_call.1} parent=1 // pred_check_branch
      %42 = sbr.rel (0) target = $region13
    $region12: #{tpu_custom_call.1} parent=1 // pred_region
      %s43 = sadd.s32 0, 0
      %s45 = ssub.s32 384, 384
      %46 = vsyncadd [#allocation6], %s45
      %s47 = smul.addr %s43, 3
      %s48 = smul.addr %s47, 128
      %s49 = scalar_lea.hbm %s2, %s48
      %s51 = sshll.u32 [#allocation7], 4
      %s52 = int_to_ptr.vmem [resolvable:$true] %s51
      %54 = dma.hbm_to_vmem [thread:$0]  %s49, 384, %s52, [#allocation6]
    $region13: #{tpu_custom_call.1} parent=1 // pred_fallthru
      _
    // Predicated region
    $region14: #{tpu_custom_call.1} parent=1 // pred_check
      _
    $region15: #{tpu_custom_call.1} parent=1 // pred_check_branch
      %56 = sbr.rel (0) target = $region17
    $region16: #{tpu_custom_call.1} parent=1 // pred_region
      %s57 = sadd.s32 0, 0
      %p58 = scmp.lt.s32.totalorder %s57, 0
      %s59 = scalar_select %p58, %s57, 0
      %s60 = smul.addr %s59, 8
      %s61 = scalar_lea.vmem %s3, %s60
      %s62 = sadd.s32 0, 0
    $region17: #{tpu_custom_call.1} parent=1 // pred_fallthru
      _
    // Predicated region
    $region18: #{tpu_custom_call.1} parent=1 // pred_check
      _
    $region19: #{tpu_custom_call.1} parent=1 // pred_check_branch
      %64 = sbr.rel (0) target = $region21
    $region20: #{tpu_custom_call.1} parent=1 // pred_region
      %65 = dma.done [#allocation3], 6144
    $region21: #{tpu_custom_call.1} parent=1 // pred_fallthru
      _
    // Predicated region
    $region22: #{tpu_custom_call.1} parent=1 // pred_check
      _
    $region23: #{tpu_custom_call.1} parent=1 // pred_check_branch
      %67 = sbr.rel (0) target = $region25
    $region24: #{tpu_custom_call.1} parent=1 // pred_region
      %68 = dma.done [#allocation6], 384
    $region25: #{tpu_custom_call.1} parent=1 // pred_fallthru
      _
    // Predicated region
    $region26: #{tpu_custom_call.1} parent=1 // pred_check
      _
    $region27: #{tpu_custom_call.1} parent=1 // pred_check_branch
      %70 = sbr.rel (0) target = $region29
    $region28: #{tpu_custom_call.1} parent=1 // pred_region
      %71 = dma.done [#allocation6], 384
    $region29: #{tpu_custom_call.1} parent=1 // pred_fallthru
      _
    %s72 = sadd.s32 0, 0
    %p73 = scmp.lt.s32.totalorder %s72, 0
    %s74 = scalar_select %p73, %s72, 0
    %s75 = smul.addr %s74, 8
    %s76 = scalar_lea.vmem %s3, %s75
    %s77 = sadd.s32 0, 0
    %s78 = sadd.s32 0, 0
    %s79 = sadd.s32 0, 0
    %p80 = scmp.lt.s32.totalorder %s79, 0
    %s81 = scalar_select %p80, %s79, 0
    %s82 = smul.addr %s81, 8
    %s83 = scalar_lea.vmem %s3, %s82
    %s84 = sadd.s32 0, 0
    %p85 = scmp.eq.s32.totalorder 0, 0
    // Predicated region
    $region30: #{tpu_custom_call.1} parent=1 // pred_check
      %p86 = pneg %p85
    $region31: #{tpu_custom_call.1} parent=1 // pred_check_branch
      %88 = sbr.rel (%p86) target = $region33
    $region32: #{tpu_custom_call.1} parent=1 // pred_region
      %89 = vst [vmem:[#allocation8] sm:$0xff] 0.0
      %90 = vst [vmem:[#allocation8 + $0x8] sm:$0xff] 0.0
      %91 = vst [vmem:[#allocation8 + $0x10] sm:$0xff] 0.0
      %92 = vst [vmem:[#allocation9] sm:$0xff] 0.0
    $region33: #{tpu_custom_call.1} parent=1 // pred_fallthru
      _
    %v93 = vld [vmem:[#allocation5] sm:$0xff]
    %v94 = vld [vmem:[#allocation5 + $0x8] sm:$0xff]
    %v95 = vld [vmem:[#allocation5 + $0x10] sm:$0xff]
    %v96 = vld [vmem:[#allocation7] sm:$0xff]
    %v97 = vld [vmem:[#allocation7 + $0x8] sm:$0xff]
    %v98 = vld [vmem:[#allocation7 + $0x10] sm:$0xff]
    %v99 = vld [vmem:[%s83] sm:$0xff]
    %v100 = vsub.f32 %v96, %v93
    %v101 = vsub.f32 %v97, %v94
    %v102 = vsub.f32 %v98, %v95
    %v103 = vmul.f32 %v100, %v100
    %v104 = vmul.f32 %v101, %v101
    %v105 = vmul.f32 %v102, %v102
    %106 = vrot.lane.b32.xlu0 %v103, 1
    %v107 = vpop.permute.xlu0 %106
    %108 = vrot.lane.b32.xlu0 %v104, 1
    %v109 = vpop.permute.xlu0 %108
    %110 = vrot.lane.b32.xlu0 %v105, 1
    %v111 = vpop.permute.xlu0 %110
    %v112 = vlaneseq
    %v113 = vand.u32 %v112, 127
    %vm114 = vcmp.lt.s32.totalorder %v113, 1
    %v115 = vsel %vm114, %v109, %v111
    %v116 = vsel %vm114, %v107, %v109
    %v117 = vsel %vm114, %v111, %v107
    %v118 = vadd.f32 %v103, %v117
    %v119 = vadd.f32 %v104, %v116
    %v120 = vadd.f32 %v105, %v115
    %121 = vrot.lane.b32.xlu0 %v103, 127
    %v122 = vpop.permute.xlu0 %121
    %123 = vrot.lane.b32.xlu0 %v104, 127
    %v124 = vpop.permute.xlu0 %123
    %125 = vrot.lane.b32.xlu0 %v105, 127
    %v126 = vpop.permute.xlu0 %125
    %vm127 = vcmp.lt.s32.totalorder %v113, 127
    %v128 = vsel %vm127, %v124, %v126
    %v129 = vsel %vm127, %v122, %v124
    %v130 = vsel %vm127, %v126, %v122
    %v131 = vadd.f32 %v118, %v129
    %v132 = vadd.f32 %v119, %v128
    %v133 = vadd.f32 %v120, %v130
    %v134 = vrsqrt.pop %v131
    %v135 = vmul.f32 %v131, %v134
    %vm136 = vcmp.eq.f32.partialorder %v131, inf
    %v137 = vsel %vm136, %v131, %v135
    %vm138 = vcmp.eq.f32.partialorder %v131, 0.0
    %v139 = vand.u32 %v131, 2147483648
    %v140 = vsel %vm138, %v139, %v137
    %v141 = vrsqrt.pop %v132
    %v142 = vmul.f32 %v132, %v141
    %vm143 = vcmp.eq.f32.partialorder %v132, inf
    %v144 = vsel %vm143, %v132, %v142
    %vm145 = vcmp.eq.f32.partialorder %v132, 0.0
    %v146 = vand.u32 %v132, 2147483648
    %v147 = vsel %vm145, %v146, %v144
    %v148 = vrsqrt.pop %v133
    %v149 = vmul.f32 %v133, %v148
    %vm150 = vcmp.eq.f32.partialorder %v133, inf
    %v151 = vsel %vm150, %v133, %v149
    %vm152 = vcmp.eq.f32.partialorder %v133, 0.0
    %v153 = vand.u32 %v133, 2147483648
    %v154 = vsel %vm152, %v153, %v151
    %v155 = vld [vmem:[#allocation2] sm:$0xff]
    %v156 = vld [vmem:[#allocation2 + $0x8] sm:$0xff]
    %v157 = vld [vmem:[#allocation2 + $0x10] sm:$0xff]
    %v158 = vld [vmem:[#allocation2 + $0x18] sm:$0xff]
    %v159 = vld [vmem:[#allocation2 + $0x20] sm:$0xff]
    %v160 = vld [vmem:[#allocation2 + $0x28] sm:$0xff]
    %v161 = vld [vmem:[#allocation2 + $0x30] sm:$0xff]
    %v162 = vld [vmem:[#allocation2 + $0x38] sm:$0xff]
    %v163 = vld [vmem:[#allocation2 + $0x40] sm:$0xff]
    %v164 = vld [vmem:[#allocation2 + $0x48] sm:$0xff]
    %v165 = vld [vmem:[#allocation2 + $0x50] sm:$0xff]
    %v166 = vld [vmem:[#allocation2 + $0x58] sm:$0xff]
    %v167 = vld [vmem:[#allocation2 + $0x60] sm:$0xff]
    %v168 = vld [vmem:[#allocation2 + $0x68] sm:$0xff]
    %v169 = vld [vmem:[#allocation2 + $0x70] sm:$0xff]
    %v170 = vld [vmem:[#allocation2 + $0x78] sm:$0xff]
    %v171 = vld [vmem:[#allocation2 + $0x80] sm:$0xff]
    %v172 = vld [vmem:[#allocation2 + $0x88] sm:$0xff]
    %v173 = vld [vmem:[#allocation2 + $0x90] sm:$0xff]
    %v174 = vld [vmem:[#allocation2 + $0x98] sm:$0xff]
    %v175 = vld [vmem:[#allocation2 + $0xa0] sm:$0xff]
    %v176 = vld [vmem:[#allocation2 + $0xa8] sm:$0xff]
    %v177 = vld [vmem:[#allocation2 + $0xb0] sm:$0xff]
    %v178 = vld [vmem:[#allocation2 + $0xb8] sm:$0xff]
    %v179 = vld [vmem:[#allocation2 + $0xc0] sm:$0xff]
    %v180 = vld [vmem:[#allocation2 + $0xc8] sm:$0xff]
    %v181 = vld [vmem:[#allocation2 + $0xd0] sm:$0xff]
    %v182 = vld [vmem:[#allocation2 + $0xd8] sm:$0xff]
    %v183 = vld [vmem:[#allocation2 + $0xe0] sm:$0xff]
    %v184 = vld [vmem:[#allocation2 + $0xe8] sm:$0xff]
    %v185 = vld [vmem:[#allocation2 + $0xf0] sm:$0xff]
    %v186 = vld [vmem:[#allocation2 + $0xf8] sm:$0xff]
    %v187 = vld [vmem:[#allocation2 + $0x100] sm:$0xff]
    %v188 = vld [vmem:[#allocation2 + $0x108] sm:$0xff]
    %v189 = vld [vmem:[#allocation2 + $0x110] sm:$0xff]
    %v190 = vld [vmem:[#allocation2 + $0x118] sm:$0xff]
    %v191 = vld [vmem:[#allocation2 + $0x120] sm:$0xff]
    %v192 = vld [vmem:[#allocation2 + $0x128] sm:$0xff]
    %v193 = vld [vmem:[#allocation2 + $0x130] sm:$0xff]
    %v194 = vld [vmem:[#allocation2 + $0x138] sm:$0xff]
    %v195 = vld [vmem:[#allocation2 + $0x140] sm:$0xff]
    %v196 = vld [vmem:[#allocation2 + $0x148] sm:$0xff]
    %v197 = vld [vmem:[#allocation2 + $0x150] sm:$0xff]
    %v198 = vld [vmem:[#allocation2 + $0x158] sm:$0xff]
    %v199 = vld [vmem:[#allocation2 + $0x160] sm:$0xff]
    %v200 = vld [vmem:[#allocation2 + $0x168] sm:$0xff]
    %v201 = vld [vmem:[#allocation2 + $0x170] sm:$0xff]
    %v202 = vld [vmem:[#allocation2 + $0x178] sm:$0xff]
    %203 = vmatprep.subr.mxu0 %v156
    %204 = vmatpush1.msra.mxu0 %v155
    %205 = vmatprep.subr.mxu0 %v159
    %206 = vmatpush1.msra.mxu0 %v158
    %207 = vmatprep.subr.mxu0 %v162
    %208 = vmatpush1.msra.mxu0 %v161
    %209 = vmatprep.subr.mxu0 %v165
    %210 = vmatpush1.msra.mxu0 %v164
    %211 = vmatprep.subr.mxu0 %v168
    %212 = vmatpush1.msra.mxu0 %v167
    %213 = vmatprep.subr.mxu0 %v171
    %214 = vmatpush1.msra.mxu0 %v170
    %215 = vmatprep.subr.mxu0 %v174
    %216 = vmatpush1.msra.mxu0 %v173
    %217 = vmatprep.subr.mxu0 %v177
    %218 = vmatpush1.msra.mxu0 %v176
    %219 = vmatprep.subr.mxu0 %v180
    %220 = vmatpush1.msra.mxu0 %v179
    %221 = vmatprep.subr.mxu0 %v183
    %222 = vmatpush1.msra.mxu0 %v182
    %223 = vmatprep.subr.mxu0 %v186
    %224 = vmatpush1.msra.mxu0 %v185
    %225 = vmatprep.subr.mxu0 %v189
    %226 = vmatpush1.msra.mxu0 %v188
    %227 = vmatprep.subr.mxu0 %v192
    %228 = vmatpush1.msra.mxu0 %v191
    %229 = vmatprep.subr.mxu0 %v195
    %230 = vmatpush1.msra.mxu0 %v194
    %231 = vmatprep.subr.mxu0 %v198
    %232 = vmatpush1.msra.mxu0 %v197
    %233 = vmatprep.subr.mxu0 %v201
    %234 = vmatpush1.msra.mxu0 %v200
    %235 = vmatprep.subr.mxu0 0.0
    %236 = vmatpush1.msra.mxu0 0.0
    %237 = vmatprep.subr.mxu0 0.0
    %238 = vmatpush1.msra.mxu0 0.0
    %239 = vmatprep.subr.mxu0 0.0
    %240 = vmatpush1.msra.mxu0 0.0
    %241 = vmatprep.subr.mxu0 0.0
    %242 = vmatpush1.msra.mxu0 0.0
    %243 = vmatprep.subr.mxu0 0.0
    %244 = vmatpush1.msra.mxu0 0.0
    %245 = vmatprep.subr.mxu0 0.0
    %246 = vmatpush1.msra.mxu0 0.0
    %247 = vmatprep.subr.mxu0 0.0
    %248 = vmatpush1.msra.mxu0 0.0
    %249 = vmatprep.subr.mxu0 0.0
    %250 = vmatpush1.msra.mxu0 0.0
    %251 = vmatprep.subr.mxu0 0.0
    %252 = vmatpush1.msra.mxu0 0.0
    %253 = vmatprep.subr.mxu0 0.0
    %254 = vmatpush1.msra.mxu0 0.0
    %255 = vmatprep.subr.mxu0 0.0
    %256 = vmatpush1.msra.mxu0 0.0
    %257 = vmatprep.subr.mxu0 0.0
    %258 = vmatpush1.msra.mxu0 0.0
    %259 = vmatprep.subr.mxu0 0.0
    %260 = vmatpush1.msra.mxu0 0.0
    %261 = vmatprep.subr.mxu0 0.0
    %262 = vmatpush1.msra.mxu0 0.0
    %263 = vmatprep.subr.mxu0 0.0
    %264 = vmatpush1.msra.mxu0 0.0
    %265 = vmatprep.subr.mxu0 0.0
    %266 = vmatpush1.msra.mxu0 0.0
    %267 = vmatprep.mubr.f32.mxu0 0.0
    %268 = vmatmul.mubr.f32.gmra.mrb[0].mxu0 %v99
    %v269 = vpop.f32.mrb[0].mxu0
    %v270 = vadd.f32 0.0, %v269
    %v271 = vpop.f32.mrb[0].mxu0
    %v272 = vadd.f32 0.0, %v271
    %273 = vdwg.mxu0
    %274 = vmatprep.subr.mxu0 0.0
    %275 = vmatpush1.msra.mxu0 %v157
    %276 = vmatprep.subr.mxu0 0.0
    %277 = vmatpush1.msra.mxu0 %v160
    %278 = vmatprep.subr.mxu0 0.0
    %279 = vmatpush1.msra.mxu0 %v163
    %280 = vmatprep.subr.mxu0 0.0
    %281 = vmatpush1.msra.mxu0 %v166
    %282 = vmatprep.subr.mxu0 0.0
    %283 = vmatpush1.msra.mxu0 %v169
    %284 = vmatprep.subr.mxu0 0.0
    %285 = vmatpush1.msra.mxu0 %v172
    %286 = vmatprep.subr.mxu0 0.0
    %287 = vmatpush1.msra.mxu0 %v175
    %288 = vmatprep.subr.mxu0 0.0
    %289 = vmatpush1.msra.mxu0 %v178
    %290 = vmatprep.subr.mxu0 0.0
    %291 = vmatpush1.msra.mxu0 %v181
    %292 = vmatprep.subr.mxu0 0.0
    %293 = vmatpush1.msra.mxu0 %v184
    %294 = vmatprep.subr.mxu0 0.0
    %295 = vmatpush1.msra.mxu0 %v187
    %296 = vmatprep.subr.mxu0 0.0
    %297 = vmatpush1.msra.mxu0 %v190
    %298 = vmatprep.subr.mxu0 0.0
    %299 = vmatpush1.msra.mxu0 %v193
    %300 = vmatprep.subr.mxu0 0.0
    %301 = vmatpush1.msra.mxu0 %v196
    %302 = vmatprep.subr.mxu0 0.0
    %303 = vmatpush1.msra.mxu0 %v199
    %304 = vmatprep.subr.mxu0 0.0
    %305 = vmatpush1.msra.mxu0 %v202
    %306 = vmatprep.subr.mxu0 0.0
    %307 = vmatpush1.msra.mxu0 0.0
    %308 = vmatprep.subr.mxu0 0.0
    %309 = vmatpush1.msra.mxu0 0.0
    %310 = vmatprep.subr.mxu0 0.0
    %311 = vmatpush1.msra.mxu0 0.0
    %312 = vmatprep.subr.mxu0 0.0
    %313 = vmatpush1.msra.mxu0 0.0
    %314 = vmatprep.subr.mxu0 0.0
    %315 = vmatpush1.msra.mxu0 0.0
    %316 = vmatprep.subr.mxu0 0.0
    %317 = vmatpush1.msra.mxu0 0.0
    %318 = vmatprep.subr.mxu0 0.0
    %319 = vmatpush1.msra.mxu0 0.0
    %320 = vmatprep.subr.mxu0 0.0
    %321 = vmatpush1.msra.mxu0 0.0
    %322 = vmatprep.subr.mxu0 0.0
    %323 = vmatpush1.msra.mxu0 0.0
    %324 = vmatprep.subr.mxu0 0.0
    %325 = vmatpush1.msra.mxu0 0.0
    %326 = vmatprep.subr.mxu0 0.0
    %327 = vmatpush1.msra.mxu0 0.0
    %328 = vmatprep.subr.mxu0 0.0
    %329 = vmatpush1.msra.mxu0 0.0
    %330 = vmatprep.subr.mxu0 0.0
    %331 = vmatpush1.msra.mxu0 0.0
    %332 = vmatprep.subr.mxu0 0.0
    %333 = vmatpush1.msra.mxu0 0.0
    %334 = vmatprep.subr.mxu0 0.0
    %335 = vmatpush1.msra.mxu0 0.0
    %336 = vmatprep.subr.mxu0 0.0
    %337 = vmatpush1.msra.mxu0 0.0
    %338 = vmatprep.mubr.f32.mxu0 0.0
    %339 = vmatmul.mubr.f32.gmra.mrb[0].mxu0 %v99
    %v340 = vpop.f32.mrb[0].mxu0
    %v341 = vadd.f32 0.0, %v340
    %v342 = vpop.f32.mrb[0].mxu0
    %343 = vdwg.mxu0
    %v344 = vmul.f32 %v140, %v270
    %v345 = vmul.f32 %v147, %v272
    %v346 = vmul.f32 %v154, %v341
    %v347 = vld [vmem:[#allocation8] ss:$8 sm:$0x7]
    %v348 = vrot.slane %v344, 4
    %v349 = vadd.f32 %v344, %v348
    %v350 = vrot.slane %v349, 2
    %v351 = vadd.f32 %v349, %v350
    %v352 = vrot.slane %v351, 1
    %v353 = vadd.f32 %v351, %v352
    %v354 = vrot.slane %v345, 4
    %v355 = vadd.f32 %v345, %v354
    %v356 = vrot.slane %v355, 2
    %v357 = vadd.f32 %v355, %v356
    %v358 = vrot.slane %v357, 1
    %v359 = vadd.f32 %v357, %v358
    %v360 = vrot.slane %v346, 4
    %v361 = vadd.f32 %v346, %v360
    %v362 = vrot.slane %v361, 2
    %v363 = vadd.f32 %v361, %v362
    %v364 = vrot.slane %v363, 1
    %v365 = vadd.f32 %v363, %v364
    %v369 = vcombine.low %v353, %v359
    %v371 = vunpack.c.l.s4 1966171168
    %v372 = vunpack.c.0.s8 %v371
    %v373 = vlaneseq
    %v374 = vshrl.u32 %v373, 7
    %v375 = vsub.s32 %v372, %v374
    %v376 = vrot.slane %v369, %v375
    %v378 = vunpack.c.l.s4 1966171168
    %v379 = vunpack.c.0.s8 %v378
    %v380 = vlaneseq
    %v381 = vshrl.u32 %v380, 7
    %v382 = vsub.s32 %v379, %v381
    %v383 = vrot.slane %v365, %v382
    %v384 = vcombine.low %v376, %v383
    %v386 = vunpack.c.l.s4 1966171168
    %v387 = vunpack.c.0.s8 %v386
    %v388 = vlaneseq
    %v389 = vshrl.u32 %v388, 7
    %v390 = vsub.s32 %v387, %v389
    %v391 = vrot.slane %v384, %v390
    %v393 = vadd.f32 %v347, %v391
    %v394 = vlaneseq
    %vm395 = vcmp.ge.s32.totalorder %v394, 0
    %vm396 = vcmp.lt.s32.totalorder %v394, 384
    %vm397 = vmand %vm395, %vm396
    %398 = vst.msk [vmem:[#allocation8] ss:$8 sm:$0x7] %vm397, %v393
    %399 = vst.msk [vmem:[#allocation8] ss:$8 sm:$0x0] %vm397, %v393
    %v400 = vld [vmem:[#allocation9] sm:$0x1]
    %v401 = vrot.slane %v99, 4
    %v402 = vadd.f32 %v99, %v401
    %v403 = vrot.slane %v402, 2
    %v404 = vadd.f32 %v402, %v403
    %v405 = vrot.slane %v404, 1
    %v406 = vadd.f32 %v404, %v405
    %v407 = vadd.f32 %v400, %v406
    %408 = vst [vmem:[#allocation9] sm:$0x1] %v407
    // Predicated region
    $region34: #{tpu_custom_call.1} parent=1 // pred_check
      _
    $region35: #{tpu_custom_call.1} parent=1 // pred_check_branch
      %410 = sbr.rel (0) target = $region37
    $region36: #{tpu_custom_call.1} parent=1 // pred_region
      %s412 = ssub.s32 384, 384
      %413 = vsyncadd [#allocation4], %s412
      %s415 = sshll.u32 [#allocation8], 4
      %s416 = int_to_ptr.vmem [resolvable:$true] %s415
      %418 = dma.vmem_to_hbm [thread:$0]  %s416, 384, %s4, [#allocation4]
    $region37: #{tpu_custom_call.1} parent=1 // pred_fallthru
      _
    // Predicated region
    $region38: #{tpu_custom_call.1} parent=1 // pred_check
      _
    $region39: #{tpu_custom_call.1} parent=1 // pred_check_branch
      %420 = sbr.rel (0) target = $region41
    $region40: #{tpu_custom_call.1} parent=1 // pred_region
      %s422 = ssub.s32 128, 128
      %423 = vsyncadd [#allocation10], %s422
      %s425 = sshll.u32 [#allocation9], 4
      %s426 = int_to_ptr.vmem [resolvable:$true] %s425
      %428 = dma.vmem_to_hbm [thread:$0]  %s426, 128, %s5, [#allocation10]
    $region41: #{tpu_custom_call.1} parent=1 // pred_fallthru
      _
    // Predicated region
    $region42: #{tpu_custom_call.1} parent=1 // pred_check
      _
    $region43: #{tpu_custom_call.1} parent=1 // pred_check_branch
      %430 = sbr.rel (0) target = $region45
    $region44: #{tpu_custom_call.1} parent=1 // pred_region
      %431 = dma.done [#allocation4], 384
    $region45: #{tpu_custom_call.1} parent=1 // pred_fallthru
      _
    // Predicated region
    $region46: #{tpu_custom_call.1} parent=1 // pred_check
      _
    $region47: #{tpu_custom_call.1} parent=1 // pred_check_branch
      %433 = sbr.rel (0) target = $region49
    $region48: #{tpu_custom_call.1} parent=1 // pred_region
      %434 = dma.done [#allocation10], 128
    $region49: #{tpu_custom_call.1} parent=1 // pred_fallthru
      _
    %435 = vsyncpa [#allocation3], 1
    %436 = vsyncpa [#allocation6], 1
    %437 = vsyncpa [#allocation4], 1
    %438 = vsyncpa [#allocation10], 1

</llo_original>
